<compile_context>
chip_gen: v5e
topology: v5e:2x2
jax: 0.10.0
libtpu: 0.0.40
codegen_flags: <defaults>
</compile_context>

<pallas_src>
import jax
import jax.numpy as jnp
from jax.experimental import pallas as pl
from jax.experimental.pallas import tpu as pltpu

EPS = 1e-5
NEG_BIG = -1e30  # bias for padded softmax columns -> exp underflows to 0 exactly


def _mlp_kernel(x_ref, w1_ref, b1_ref, w2_ref, b2_ref, w3_ref, b3_ref, out_ref):
    # Layer 1: Linear (eval-mode BN folded in) + ReLU.
    # TODO(synk): train-mode Dropout(p=0.5) / batch-stat BatchNorm not
    # implemented (eval semantics: dropout is identity, BN uses running stats).
    x = x_ref[...].astype(w1_ref.dtype)
    h = jnp.dot(x, w1_ref[...], preferred_element_type=jnp.float32) + b1_ref[...]
    h = jnp.maximum(h, 0.0)

    # Layer 2: Linear (BN folded) + ReLU.
    h = jnp.dot(h.astype(w2_ref.dtype), w2_ref[...],
                preferred_element_type=jnp.float32) + b2_ref[...]
    h = jnp.maximum(h, 0.0)

    # Layer 3: Linear + Softmax(dim=1).  Padded columns carry bias -1e30.
    logits = jnp.dot(h.astype(w3_ref.dtype), w3_ref[...],
                     preferred_element_type=jnp.float32) + b3_ref[...]
    m = jnp.max(logits, axis=1, keepdims=True)
    e = jnp.exp(logits - m)
    s = jnp.sum(e, axis=1, keepdims=True)
    r = pl.reciprocal(s, approx=True)
    r = r * (2.0 - s * r)  # one Newton refinement -> ~f32 accuracy
    out_ref[...] = e * r


def _round_up(n, m):
    return ((n + m - 1) // m) * m


def prepare_params(params, *, weight_dtype=jnp.bfloat16):
    """One-time parameter preparation (do this once, cache, reuse per call).

    Folds eval-mode BatchNorm into the adjacent Linear, transposes to
    (in, out), pads every feature dim to a multiple of 128 (padded softmax
    columns get a -1e30 bias so exp()==0 exactly) and casts weights to
    `weight_dtype` (bf16 by default for MXU throughput; biases stay f32).
    """
    (w1, b1, g1, be1, rm1, rv1,
     w2, b2, g2, be2, rm2, rv2,
     w3, b3) = params

    D1, D0 = w1.shape
    D2 = w2.shape[0]
    D3 = w3.shape[0]

    s1 = g1 * jax.lax.rsqrt(rv1 + EPS)
    s2 = g2 * jax.lax.rsqrt(rv2 + EPS)
    w1f = w1.T * s1[None, :]                 # (D0, D1)
    b1f = (b1 - rm1) * s1 + be1              # (D1,)
    w2f = w2.T * s2[None, :]                 # (D1, D2)
    b2f = (b2 - rm2) * s2 + be2              # (D2,)
    w3f = w3.T                               # (D2, D3)
    b3f = b3                                 # (D3,)

    D0p, D1p, D2p, D3p = (_round_up(d, 128) for d in (D0, D1, D2, D3))
    w1f = jnp.pad(w1f, ((0, D0p - D0), (0, D1p - D1)))
    b1f = jnp.pad(b1f, (0, D1p - D1))
    w2f = jnp.pad(w2f, ((0, D1p - D1), (0, D2p - D2)))
    b2f = jnp.pad(b2f, (0, D2p - D2))
    w3f = jnp.pad(w3f, ((0, D2p - D2), (0, D3p - D3)))
    b3f = jnp.pad(b3f, (0, D3p - D3), constant_values=NEG_BIG)

    wdt = jnp.dtype(weight_dtype)
    return {
        "w1": w1f.astype(wdt), "b1": b1f.reshape(1, -1),
        "w2": w2f.astype(wdt), "b2": b2f.reshape(1, -1),
        "w3": w3f.astype(wdt), "b3": b3f.reshape(1, -1),
        "D0": D0, "D3": D3,
        "dims_padded": (D0p, D1p, D2p, D3p),
        "weight_dtype": wdt,
    }


def _default_tile_b(B, D1p, D2p):
    # Small B: one grid step; the kernel is fixed-overhead bound anyway.
    if B <= 128:
        return _round_up(B, 8)
    # Large B: >=2 grid steps so megacore / v7x's two TensorCores both get
    # work; 128-aligned M keeps all MXU tiles full on every generation.
    # Cap at 256 rows when hidden dims are large to bound the inter-layer
    # activation (tile_b x D1p / D2p) live VMEM footprint on v7x (64 MiB).
    cap = 256 if max(D1p, D2p) >= 1024 else 512
    return min(cap, _round_up(pl.cdiv(B, 2), 128))


def _vmem_budget(tile_b, D0p, D1p, D2p, D3p, w_itemsize):
    weights = (D0p * D1p + D1p * D2p + D2p * D3p) * w_itemsize  # single-buffered
    biases = (D1p + D2p + D3p) * 4
    io_tiles = 2 * tile_b * (D0p + D3p) * 4                     # dbl-buffered x/out
    acts = tile_b * (D1p + D2p) * (4 + w_itemsize)              # f32 acts + casts
    need = weights + biases + io_tiles + acts
    limit = int(min(64 * 1024 * 1024, max(int(need * 1.25), 16 * 1024 * 1024)))
    return limit, need


def neural_network_forward(x, prepared, *, tile_b=None):
    """Fused MLP forward. x: (B, dims[0]) f32; `prepared` from prepare_params().
    Returns (B, dims[3]) float32 softmax probabilities."""
    B, D0 = x.shape
    if D0 != prepared["D0"]:
        raise ValueError(f"x has {D0} features, params expect {prepared['D0']}")
    D0p, D1p, D2p, D3p = prepared["dims_padded"]
    D3 = prepared["D3"]
    wdt = prepared["weight_dtype"]

    if tile_b is None:
        tile_b = _default_tile_b(B, D1p, D2p)
    Bp = _round_up(B, tile_b)
    xp = x
    if Bp != B or D0p != D0:
        xp = jnp.pad(x, ((0, Bp - B), (0, D0p - D0)))

    grid = (Bp // tile_b,)

    vmem_bytes, need = _vmem_budget(tile_b, D0p, D1p, D2p, D3p, wdt.itemsize)
    if need > 48 * 1024 * 1024:
        # TODO(synk): for hidden dims this large, stop keeping all weights
        # resident: split into per-layer pallas_calls or emit_pipeline over
        # (K, N) weight tiles so v7x's 64 MiB VMEM isn't exceeded.
        raise ValueError(
            f"all-resident VMEM footprint {need} B exceeds the safe budget; "
            "split the fused kernel into per-layer calls for these dims.")

    cost = pl.CostEstimate(
        flops=2 * Bp * (D0p * D1p + D1p * D2p + D2p * D3p),
        transcendentals=Bp * D3p,
        bytes_accessed=(xp.size * 4
                        + (D0p * D1p + D1p * D2p + D2p * D3p) * wdt.itemsize
                        + (D1p + D2p + D3p) * 4
                        + Bp * D3p * 4),
    )

    def build(single_buffer_weights):
        if single_buffer_weights:
            # Weights/biases are grid-invariant: one VMEM buffer is enough.
            const = lambda shape: pl.BlockSpec(shape, lambda i: (0, 0),
                                               pipeline_mode=pl.Buffered(1))
        else:
            const = lambda shape: pl.BlockSpec(shape, lambda i: (0, 0))
        return pl.pallas_call(
            _mlp_kernel,
            out_shape=jax.ShapeDtypeStruct((Bp, D3p), jnp.float32),
            grid_spec=pltpu.PrefetchScalarGridSpec(
                num_scalar_prefetch=0,
                grid=grid,
                in_specs=[
                    pl.BlockSpec((tile_b, D0p), lambda i: (i, 0)),   # x tile
                    const((D0p, D1p)), const((1, D1p)),              # w1', b1'
                    const((D1p, D2p)), const((1, D2p)),              # w2', b2'
                    const((D2p, D3p)), const((1, D3p)),              # w3,  b3
                ],
                out_specs=pl.BlockSpec((tile_b, D3p), lambda i: (i, 0)),
            ),
            compiler_params=pltpu.CompilerParams(
                dimension_semantics=("parallel",),
                vmem_limit_bytes=vmem_bytes),
            cost_estimate=cost,
        )

    args = (xp, prepared["w1"], prepared["b1"], prepared["w2"], prepared["b2"],
            prepared["w3"], prepared["b3"])
    try:
        out = build(True)(*args)
    except Exception:
        # pl.Buffered(1) unsupported in this jax build -> default buffering.
        out = build(False)(*args)

    return out[:B, :D3]


def init_params(key, dims):
    """Deterministic parameter init matching the module's shapes."""
    d0, d1, d2, d3 = dims
    ks = jax.random.split(key, 10)

    def linear(kw, kb, fan_in, fan_out):
        bound = 1.0 / jnp.sqrt(fan_in)
        w = jax.random.uniform(kw, (fan_out, fan_in), jnp.float32, -bound, bound)
        b = jax.random.uniform(kb, (fan_out,), jnp.float32, -bound, bound)
        return w, b

    w1, b1 = linear(ks[0], ks[1], d0, d1)
    w2, b2 = linear(ks[2], ks[3], d1, d2)
    w3, b3 = linear(ks[4], ks[5], d2, d3)

    # Non-trivial BN params so the folded BN math is actually exercised.
    g1 = 1.0 + 0.1 * jax.random.normal(ks[6], (d1,), jnp.float32)
    be1 = 0.1 * jax.random.normal(ks[7], (d1,), jnp.float32)
    rm1 = 0.05 * jax.random.normal(ks[8], (d1,), jnp.float32)
    rv1 = jnp.ones((d1,), jnp.float32) + 0.1 * jnp.abs(
        jax.random.normal(ks[9], (d1,), jnp.float32))

    g2 = jnp.ones((d2,), jnp.float32) * 0.9
    be2 = jnp.full((d2,), 0.05, jnp.float32)
    rm2 = jnp.zeros((d2,), jnp.float32)
    rv2 = jnp.ones((d2,), jnp.float32)

    return (w1, b1, g1, be1, rm1, rv1,
            w2, b2, g2, be2, rm2, rv2,
            w3, b3)


def reference_forward(x, params):
    """Pure-JAX reference (eval-mode PyTorch semantics)."""
    (w1, b1, g1, be1, rm1, rv1,
     w2, b2, g2, be2, rm2, rv2,
     w3, b3) = params
    h = x @ w1.T + b1
    h = (h - rm1) / jnp.sqrt(rv1 + EPS) * g1 + be1
    h = jnp.maximum(h, 0.0)
    h = h @ w2.T + b2
    h = (h - rm2) / jnp.sqrt(rv2 + EPS) * g2 + be2
    h = jnp.maximum(h, 0.0)
    logits = h @ w3.T + b3
    return jax.nn.softmax(logits, axis=1)


if __name__ == "__main__":
    # NOTE: at these demo shapes the kernel is pure fixed-overhead/latency
    # bound; perf tuning only shows up at representative large B / dims.
    dims = [32, 64, 48, 16]
    B = 16

    key = jax.random.PRNGKey(0)
    kx, kp = jax.random.split(key)
    x = jax.random.normal(kx, (B, dims[0]), jnp.float32)
    params = init_params(kp, dims)
    ref = reference_forward(x, params)

    # f32-weight path: exact (1e-5) parity with the eval-mode reference.
    prep_f32 = prepare_params(params, weight_dtype=jnp.float32)
    out_f32 = jax.block_until_ready(neural_network_forward(x, prep_f32))
    assert out_f32.shape == (B, dims[3])
    assert jnp.allclose(out_f32, ref, atol=1e-5, rtol=1e-5), "f32 mismatch vs reference"
    assert jnp.allclose(jnp.sum(out_f32, axis=1), 1.0, atol=1e-5), "softmax rows must sum to 1"

    # Default bf16-weight path (MXU fast path): looser tolerance on probs.
    prep_bf16 = prepare_params(params)  # weight_dtype defaults to bf16
    out_bf16 = jax.block_until_ready(neural_network_forward(x, prep_bf16))
    assert out_bf16.shape == (B, dims[3])
    assert jnp.allclose(out_bf16, ref, atol=2e-2, rtol=2e-2), "bf16 mismatch vs reference"
    assert jnp.allclose(jnp.sum(out_bf16, axis=1), 1.0, atol=1e-5), "softmax rows must sum to 1"

    print("KERNEL_OK")
</pallas_src>

<mosaic_0001>
module attributes {stable_mosaic.version = 11 : i64} {
  func.func @_mlp_kernel(%arg0: i32, %arg1: memref<16x128xf32, #tpu.memory_space<vmem>>, %arg2: memref<128x128xf32, #tpu.memory_space<vmem>>, %arg3: memref<1x128xf32, #tpu.memory_space<vmem>>, %arg4: memref<128x128xf32, #tpu.memory_space<vmem>>, %arg5: memref<1x128xf32, #tpu.memory_space<vmem>>, %arg6: memref<128x128xf32, #tpu.memory_space<vmem>>, %arg7: memref<1x128xf32, #tpu.memory_space<vmem>>, %arg8: memref<16x128xf32, #tpu.memory_space<vmem>>) attributes {dimension_semantics = [#tpu.dimension_semantics<parallel>], iteration_bounds = array<i64: 1>, scalar_prefetch = 0 : i64, scratch_operands = 0 : i64, tpu.core_type = #tpu.core_type<tc>, window_params = [{transform_indices = @transform_0, window_bounds = array<i64: 16, 128>}, {pipeline_mode = #tpu.pipeline_mode<synchronous>, transform_indices = @transform_1, window_bounds = array<i64: 128, 128>}, {pipeline_mode = #tpu.pipeline_mode<synchronous>, transform_indices = @transform_2, window_bounds = array<i64: 1, 128>}, {pipeline_mode = #tpu.pipeline_mode<synchronous>, transform_indices = @transform_3, window_bounds = array<i64: 128, 128>}, {pipeline_mode = #tpu.pipeline_mode<synchronous>, transform_indices = @transform_4, window_bounds = array<i64: 1, 128>}, {pipeline_mode = #tpu.pipeline_mode<synchronous>, transform_indices = @transform_5, window_bounds = array<i64: 128, 128>}, {pipeline_mode = #tpu.pipeline_mode<synchronous>, transform_indices = @transform_6, window_bounds = array<i64: 1, 128>}, {transform_indices = @transform_7, window_bounds = array<i64: 16, 128>}]} {
    %c0 = arith.constant 0 : index
    %c0_0 = arith.constant 0 : index
    %0 = vector.load %arg1[%c0, %c0_0] : memref<16x128xf32, #tpu.memory_space<vmem>>, vector<16x128xf32>
    %c0_1 = arith.constant 0 : index
    %c0_2 = arith.constant 0 : index
    %1 = vector.load %arg2[%c0_1, %c0_2] : memref<128x128xf32, #tpu.memory_space<vmem>>, vector<128x128xf32>
    %cst = arith.constant dense<0.000000e+00> : vector<16x128xf32>
    %2 = tpu.matmul %0, %1, %cst {dimension_numbers = #tpu.dot_dimension_numbers<[1], [0], [0], [1], [0, 0, 1, 1], [], []>} : vector<16x128xf32>, vector<128x128xf32>, vector<16x128xf32> -> vector<16x128xf32>
    %c0_3 = arith.constant 0 : index
    %c0_4 = arith.constant 0 : index
    %3 = vector.load %arg3[%c0_3, %c0_4] : memref<1x128xf32, #tpu.memory_space<vmem>>, vector<1x128xf32>
    %4 = vector.broadcast %3 : vector<1x128xf32> to vector<16x128xf32>
    %5 = arith.addf %2, %4 : vector<16x128xf32>
    %cst_5 = arith.constant 0.000000e+00 : f32
    %6 = vector.broadcast %cst_5 : f32 to vector<16x128xf32>
    %7 = arith.maximumf %5, %6 : vector<16x128xf32>
    %c0_6 = arith.constant 0 : index
    %c0_7 = arith.constant 0 : index
    %8 = vector.load %arg4[%c0_6, %c0_7] : memref<128x128xf32, #tpu.memory_space<vmem>>, vector<128x128xf32>
    %cst_8 = arith.constant dense<0.000000e+00> : vector<16x128xf32>
    %9 = tpu.matmul %7, %8, %cst_8 {dimension_numbers = #tpu.dot_dimension_numbers<[1], [0], [0], [1], [0, 0, 1, 1], [], []>} : vector<16x128xf32>, vector<128x128xf32>, vector<16x128xf32> -> vector<16x128xf32>
    %c0_9 = arith.constant 0 : index
    %c0_10 = arith.constant 0 : index
    %10 = vector.load %arg5[%c0_9, %c0_10] : memref<1x128xf32, #tpu.memory_space<vmem>>, vector<1x128xf32>
    %11 = vector.broadcast %10 : vector<1x128xf32> to vector<16x128xf32>
    %12 = arith.addf %9, %11 : vector<16x128xf32>
    %cst_11 = arith.constant 0.000000e+00 : f32
    %13 = vector.broadcast %cst_11 : f32 to vector<16x128xf32>
    %14 = arith.maximumf %12, %13 : vector<16x128xf32>
    %c0_12 = arith.constant 0 : index
    %c0_13 = arith.constant 0 : index
    %15 = vector.load %arg6[%c0_12, %c0_13] : memref<128x128xf32, #tpu.memory_space<vmem>>, vector<128x128xf32>
    %cst_14 = arith.constant dense<0.000000e+00> : vector<16x128xf32>
    %16 = tpu.matmul %14, %15, %cst_14 {dimension_numbers = #tpu.dot_dimension_numbers<[1], [0], [0], [1], [0, 0, 1, 1], [], []>} : vector<16x128xf32>, vector<128x128xf32>, vector<16x128xf32> -> vector<16x128xf32>
    %c0_15 = arith.constant 0 : index
    %c0_16 = arith.constant 0 : index
    %17 = vector.load %arg7[%c0_15, %c0_16] : memref<1x128xf32, #tpu.memory_space<vmem>>, vector<1x128xf32>
    %18 = vector.broadcast %17 : vector<1x128xf32> to vector<16x128xf32>
    %19 = arith.addf %16, %18 : vector<16x128xf32>
    %cst_17 = arith.constant dense<0xFF800000> : vector<16xf32>
    %20 = vector.multi_reduction <maximumf>, %19, %cst_17 [1] : vector<16x128xf32> to vector<16xf32>
    %21 = vector.shape_cast %20 : vector<16xf32> to vector<16x1xf32>
    %22 = vector.broadcast %21 : vector<16x1xf32> to vector<16x128xf32>
    %23 = arith.subf %19, %22 : vector<16x128xf32>
    %24 = math.exp %23 : vector<16x128xf32>
    %cst_18 = arith.constant dense<0.000000e+00> : vector<16xf32>
    %25 = vector.multi_reduction <add>, %24, %cst_18 [1] : vector<16x128xf32> to vector<16xf32>
    %26 = vector.shape_cast %25 : vector<16xf32> to vector<16x1xf32>
    %27 = tpu.reciprocal %26 {approx = true} : vector<16x1xf32> -> vector<16x1xf32>
    %28 = arith.mulf %26, %27 : vector<16x1xf32>
    %cst_19 = arith.constant 2.000000e+00 : f32
    %29 = vector.broadcast %cst_19 : f32 to vector<16x1xf32>
    %30 = arith.subf %29, %28 : vector<16x1xf32>
    %31 = arith.mulf %27, %30 : vector<16x1xf32>
    %32 = vector.broadcast %31 : vector<16x1xf32> to vector<16x128xf32>
    %33 = arith.mulf %24, %32 : vector<16x128xf32>
    %c0_20 = arith.constant 0 : index
    %c0_21 = arith.constant 0 : index
    %34 = vector.load %arg8[%c0_20, %c0_21] : memref<16x128xf32, #tpu.memory_space<vmem>>, vector<16x128xf32>
    tpu.vector_store %arg8[%c0_20, %c0_21], %33 {strides = array<i32>} : memref<16x128xf32, #tpu.memory_space<vmem>>, vector<16x128xf32>,
    return
  }
  func.func @transform_0(%arg0: i32) -> (i32, i32) {
    %c0_i32 = arith.constant 0 : i32
    %c0_i32_0 = arith.constant 0 : i32
    return %arg0, %c0_i32 : i32, i32
  }
  func.func @transform_1(%arg0: i32) -> (i32, i32) {
    %c0_i32 = arith.constant 0 : i32
    %c0_i32_0 = arith.constant 0 : i32
    %c0_i32_1 = arith.constant 0 : i32
    return %c0_i32, %c0_i32_0 : i32, i32
  }
  func.func @transform_2(%arg0: i32) -> (i32, i32) {
    %c0_i32 = arith.constant 0 : i32
    %c0_i32_0 = arith.constant 0 : i32
    %c0_i32_1 = arith.constant 0 : i32
    return %c0_i32, %c0_i32_0 : i32, i32
  }
  func.func @transform_3(%arg0: i32) -> (i32, i32) {
    %c0_i32 = arith.constant 0 : i32
    %c0_i32_0 = arith.constant 0 : i32
    %c0_i32_1 = arith.constant 0 : i32
    return %c0_i32, %c0_i32_0 : i32, i32
  }
  func.func @transform_4(%arg0: i32) -> (i32, i32) {
    %c0_i32 = arith.constant 0 : i32
    %c0_i32_0 = arith.constant 0 : i32
    %c0_i32_1 = arith.constant 0 : i32
    return %c0_i32, %c0_i32_0 : i32, i32
  }
  func.func @transform_5(%arg0: i32) -> (i32, i32) {
    %c0_i32 = arith.constant 0 : i32
    %c0_i32_0 = arith.constant 0 : i32
    %c0_i32_1 = arith.constant 0 : i32
    return %c0_i32, %c0_i32_0 : i32, i32
  }
  func.func @transform_6(%arg0: i32) -> (i32, i32) {
    %c0_i32 = arith.constant 0 : i32
    %c0_i32_0 = arith.constant 0 : i32
    %c0_i32_1 = arith.constant 0 : i32
    return %c0_i32, %c0_i32_0 : i32, i32
  }
  func.func @transform_7(%arg0: i32) -> (i32, i32) {
    %c0_i32 = arith.constant 0 : i32
    %c0_i32_0 = arith.constant 0 : i32
    return %arg0, %c0_i32 : i32, i32
  }
}

module attributes {stable_mosaic.version = 11 : i64} {
  func.func @_mlp_kernel(%arg0: i32, %arg1: memref<16x128xf32, #tpu.memory_space<vmem>>, %arg2: memref<128x128xf32, #tpu.memory_space<vmem>>, %arg3: memref<1x128xf32, #tpu.memory_space<vmem>>, %arg4: memref<128x128xf32, #tpu.memory_space<vmem>>, %arg5: memref<1x128xf32, #tpu.memory_space<vmem>>, %arg6: memref<128x128xf32, #tpu.memory_space<vmem>>, %arg7: memref<1x128xf32, #tpu.memory_space<vmem>>, %arg8: memref<16x128xf32, #tpu.memory_space<vmem>>) attributes {dimension_semantics = [#tpu.dimension_semantics<parallel>], iteration_bounds = array<i64: 1>, scalar_prefetch = 0 : i64, scratch_operands = 0 : i64, tpu.core_type = #tpu.core_type<tc>, window_params = [{transform_indices = @transform_0, window_bounds = array<i64: 16, 128>}, {pipeline_mode = #tpu.pipeline_mode<synchronous>, transform_indices = @transform_1, window_bounds = array<i64: 128, 128>}, {pipeline_mode = #tpu.pipeline_mode<synchronous>, transform_indices = @transform_2, window_bounds = array<i64: 1, 128>}, {pipeline_mode = #tpu.pipeline_mode<synchronous>, transform_indices = @transform_3, window_bounds = array<i64: 128, 128>}, {pipeline_mode = #tpu.pipeline_mode<synchronous>, transform_indices = @transform_4, window_bounds = array<i64: 1, 128>}, {pipeline_mode = #tpu.pipeline_mode<synchronous>, transform_indices = @transform_5, window_bounds = array<i64: 128, 128>}, {pipeline_mode = #tpu.pipeline_mode<synchronous>, transform_indices = @transform_6, window_bounds = array<i64: 1, 128>}, {transform_indices = @transform_7, window_bounds = array<i64: 16, 128>}]} {
    %c0 = arith.constant 0 : index
    %c0_0 = arith.constant 0 : index
    %0 = vector.load %arg1[%c0, %c0_0] : memref<16x128xf32, #tpu.memory_space<vmem>>, vector<16x128xf32>
    %c0_1 = arith.constant 0 : index
    %c0_2 = arith.constant 0 : index
    %1 = vector.load %arg2[%c0_1, %c0_2] : memref<128x128xf32, #tpu.memory_space<vmem>>, vector<128x128xf32>
    %cst = arith.constant dense<0.000000e+00> : vector<16x128xf32>
    %2 = tpu.matmul %0, %1, %cst {dimension_numbers = #tpu.dot_dimension_numbers<[1], [0], [0], [1], [0, 0, 1, 1], [], []>} : vector<16x128xf32>, vector<128x128xf32>, vector<16x128xf32> -> vector<16x128xf32>
    %c0_3 = arith.constant 0 : index
    %c0_4 = arith.constant 0 : index
    %3 = vector.load %arg3[%c0_3, %c0_4] : memref<1x128xf32, #tpu.memory_space<vmem>>, vector<1x128xf32>
    %4 = vector.broadcast %3 : vector<1x128xf32> to vector<16x128xf32>
    %5 = arith.addf %2, %4 : vector<16x128xf32>
    %cst_5 = arith.constant 0.000000e+00 : f32
    %6 = vector.broadcast %cst_5 : f32 to vector<16x128xf32>
    %7 = arith.maximumf %5, %6 : vector<16x128xf32>
    %c0_6 = arith.constant 0 : index
    %c0_7 = arith.constant 0 : index
    %8 = vector.load %arg4[%c0_6, %c0_7] : memref<128x128xf32, #tpu.memory_space<vmem>>, vector<128x128xf32>
    %cst_8 = arith.constant dense<0.000000e+00> : vector<16x128xf32>
    %9 = tpu.matmul %7, %8, %cst_8 {dimension_numbers = #tpu.dot_dimension_numbers<[1], [0], [0], [1], [0, 0, 1, 1], [], []>} : vector<16x128xf32>, vector<128x128xf32>, vector<16x128xf32> -> vector<16x128xf32>
    %c0_9 = arith.constant 0 : index
    %c0_10 = arith.constant 0 : index
    %10 = vector.load %arg5[%c0_9, %c0_10] : memref<1x128xf32, #tpu.memory_space<vmem>>, vector<1x128xf32>
    %11 = vector.broadcast %10 : vector<1x128xf32> to vector<16x128xf32>
    %12 = arith.addf %9, %11 : vector<16x128xf32>
    %cst_11 = arith.constant 0.000000e+00 : f32
    %13 = vector.broadcast %cst_11 : f32 to vector<16x128xf32>
    %14 = arith.maximumf %12, %13 : vector<16x128xf32>
    %c0_12 = arith.constant 0 : index
    %c0_13 = arith.constant 0 : index
    %15 = vector.load %arg6[%c0_12, %c0_13] : memref<128x128xf32, #tpu.memory_space<vmem>>, vector<128x128xf32>
    %cst_14 = arith.constant dense<0.000000e+00> : vector<16x128xf32>
    %16 = tpu.matmul %14, %15, %cst_14 {dimension_numbers = #tpu.dot_dimension_numbers<[1], [0], [0], [1], [0, 0, 1, 1], [], []>} : vector<16x128xf32>, vector<128x128xf32>, vector<16x128xf32> -> vector<16x128xf32>
    %c0_15 = arith.constant 0 : index
    %c0_16 = arith.constant 0 : index
    %17 = vector.load %arg7[%c0_15, %c0_16] : memref<1x128xf32, #tpu.memory_space<vmem>>, vector<1x128xf32>
    %18 = vector.broadcast %17 : vector<1x128xf32> to vector<16x128xf32>
    %19 = arith.addf %16, %18 : vector<16x128xf32>
    %cst_17 = arith.constant dense<0xFF800000> : vector<16xf32>
    %20 = vector.multi_reduction <maximumf>, %19, %cst_17 [1] : vector<16x128xf32> to vector<16xf32>
    %21 = vector.shape_cast %20 : vector<16xf32> to vector<16x1xf32>
    %22 = vector.broadcast %21 : vector<16x1xf32> to vector<16x128xf32>
    %23 = arith.subf %19, %22 : vector<16x128xf32>
    %24 = math.exp %23 : vector<16x128xf32>
    %cst_18 = arith.constant dense<0.000000e+00> : vector<16xf32>
    %25 = vector.multi_reduction <add>, %24, %cst_18 [1] : vector<16x128xf32> to vector<16xf32>
    %26 = vector.shape_cast %25 : vector<16xf32> to vector<16x1xf32>
    %27 = tpu.reciprocal %26 {approx = true} : vector<16x1xf32> -> vector<16x1xf32>
    %28 = arith.mulf %26, %27 : vector<16x1xf32>
    %cst_19 = arith.constant 2.000000e+00 : f32
    %29 = vector.broadcast %cst_19 : f32 to vector<16x1xf32>
    %30 = arith.subf %29, %28 : vector<16x1xf32>
    %31 = arith.mulf %27, %30 : vector<16x1xf32>
    %32 = vector.broadcast %31 : vector<16x1xf32> to vector<16x128xf32>
    %33 = arith.mulf %24, %32 : vector<16x128xf32>
    %c0_20 = arith.constant 0 : index
    %c0_21 = arith.constant 0 : index
    %34 = vector.load %arg8[%c0_20, %c0_21] : memref<16x128xf32, #tpu.memory_space<vmem>>, vector<16x128xf32>
    tpu.vector_store %arg8[%c0_20, %c0_21], %33 {strides = array<i32>} : memref<16x128xf32, #tpu.memory_space<vmem>>, vector<16x128xf32>,
    return
  }
  func.func @transform_0(%arg0: i32) -> (i32, i32) {
    %c0_i32 = arith.constant 0 : i32
    %c0_i32_0 = arith.constant 0 : i32
    return %arg0, %c0_i32 : i32, i32
  }
  func.func @transform_1(%arg0: i32) -> (i32, i32) {
    %c0_i32 = arith.constant 0 : i32
    %c0_i32_0 = arith.constant 0 : i32
    %c0_i32_1 = arith.constant 0 : i32
    return %c0_i32, %c0_i32_0 : i32, i32
  }
  func.func @transform_2(%arg0: i32) -> (i32, i32) {
    %c0_i32 = arith.constant 0 : i32
    %c0_i32_0 = arith.constant 0 : i32
    %c0_i32_1 = arith.constant 0 : i32
    return %c0_i32, %c0_i32_0 : i32, i32
  }
  func.func @transform_3(%arg0: i32) -> (i32, i32) {
    %c0_i32 = arith.constant 0 : i32
    %c0_i32_0 = arith.constant 0 : i32
    %c0_i32_1 = arith.constant 0 : i32
    return %c0_i32, %c0_i32_0 : i32, i32
  }
  func.func @transform_4(%arg0: i32) -> (i32, i32) {
    %c0_i32 = arith.constant 0 : i32
    %c0_i32_0 = arith.constant 0 : i32
    %c0_i32_1 = arith.constant 0 : i32
    return %c0_i32, %c0_i32_0 : i32, i32
  }
  func.func @transform_5(%arg0: i32) -> (i32, i32) {
    %c0_i32 = arith.constant 0 : i32
    %c0_i32_0 = arith.constant 0 : i32
    %c0_i32_1 = arith.constant 0 : i32
    return %c0_i32, %c0_i32_0 : i32, i32
  }
  func.func @transform_6(%arg0: i32) -> (i32, i32) {
    %c0_i32 = arith.constant 0 : i32
    %c0_i32_0 = arith.constant 0 : i32
    %c0_i32_1 = arith.constant 0 : i32
    return %c0_i32, %c0_i32_0 : i32, i32
  }
  func.func @transform_7(%arg0: i32) -> (i32, i32) {
    %c0_i32 = arith.constant 0 : i32
    %c0_i32_0 = arith.constant 0 : i32
    return %arg0, %c0_i32 : i32, i32
  }
}

</mosaic_0001>

<llo_original>
// kernel: tpu_custom_call.1
$region0: #{tpu_custom_call.1}
  #allocation0 [shape = 'u32[]', space=smem, size = 0x4, offset = 0x4, fixed_abs, tag = 'smem constant byte address 0x4 - core index']
  #allocation1 [shape = 'u32[72,128]{1,0:T(1,128)}', space=vmem, size = 0x9000, scoped, tag = 'internal scratch']
  %s0 = inlined_call_operand.hbm [shape: f32[16,128], index: 0, kind: input, shape index: {}]
  %s1 = inlined_call_operand.hbm [shape: f32[128,128], index: 1, kind: input, shape index: {}]
  %s2 = inlined_call_operand.vmem [shape: f32[1,128], index: 2, kind: input, shape index: {}]
  %s3 = inlined_call_operand.hbm [shape: f32[128,128], index: 3, kind: input, shape index: {}]
  %s4 = inlined_call_operand.vmem [shape: f32[1,128], index: 4, kind: input, shape index: {}]
  %s5 = inlined_call_operand.hbm [shape: f32[128,128], index: 5, kind: input, shape index: {}]
  %s6 = inlined_call_operand.vmem [shape: f32[1,128], index: 6, kind: input, shape index: {}]
  %s7 = inlined_call_operand.hbm [shape: f32[16,128], index: 7, kind: output, shape index: {}]
  %s8 = sld [smem:[#allocation0]]
  $region54: #{tpu_custom_call.1} parent=0
    _
  %s10 = ssub.s32 1, %s8
  %s11 = scalar_select 0, %s10, %s8
  $region1: #{tpu_custom_call.1} parent=0
    #allocation2 [shape = 'u8[8192]{0}', space=vmem, size = 0x2000, scoped, tag = 'input window, operand 0, single buffered']
    #allocation3 [shape = 's32[1]{0}', space=sflag, size = 0x4, scoped, tag = 'scoped memory for tpu_custom_call.1']
    #allocation4 [shape = 's32[1]{0}', space=sflag, size = 0x4, scoped, tag = 'scoped memory for tpu_custom_call.1']
    #allocation5 [shape = 'u8[65536]{0}', space=vmem, size = 0x10000, scoped, tag = 'input window, operand 1, single buffered']
    #allocation6 [shape = 's32[1]{0}', space=sflag, size = 0x4, scoped, tag = 'scoped memory for tpu_custom_call.1']
    #allocation7 [shape = 'u8[65536]{0}', space=vmem, size = 0x10000, scoped, tag = 'input window, operand 3, single buffered']
    #allocation8 [shape = 'u8[65536]{0}', space=vmem, size = 0x10000, scoped, tag = 'input window, operand 5, single buffered']
    #allocation9 [shape = 's32[1]{0}', space=sflag, size = 0x4, scoped, tag = 'scoped memory for tpu_custom_call.1']
    #allocation10 [shape = 'u8[8192]{0}', space=vmem, size = 0x2000, scoped, tag = 'output window, operand 0, single buffered']
    %12 = vsyncpa [#allocation3], 0
    %13 = vsyncpa [#allocation6], 0
    %14 = vsyncpa [#allocation9], 0
    %15 = vsyncpa [#allocation4], 0
    // Predicated region
    $region2: #{tpu_custom_call.1} parent=1 // pred_check
      _
    $region3: #{tpu_custom_call.1} parent=1 // pred_check_branch
      %17 = sbr.rel (0) target = $region5
    $region4: #{tpu_custom_call.1} parent=1 // pred_region
      %19 = vsyncadd [#allocation3], 0
      %s20 = sshll.u32 %s0, 4
      %s21 = int_to_ptr.hbm [resolvable:$true] %s20
      %s22 = sshll.u32 [#allocation2], 4
      %s23 = int_to_ptr.vmem [resolvable:$true] %s22
      %28 = dma.hbm_to_vmem [thread:$0]  %s21, 256, %s23, [#allocation3], 128, 128, 8
    $region5: #{tpu_custom_call.1} parent=1 // pred_fallthru
      _
    // Predicated region
    $region6: #{tpu_custom_call.1} parent=1 // pred_check
      _
    $region7: #{tpu_custom_call.1} parent=1 // pred_check_branch
      %30 = sbr.rel (0) target = $region9
    $region8: #{tpu_custom_call.1} parent=1 // pred_region
      %32 = vsyncadd [#allocation6], 0
      %s33 = sshll.u32 %s1, 4
      %s34 = int_to_ptr.hbm [resolvable:$true] %s33
      %s35 = sshll.u32 [#allocation5], 4
      %s36 = int_to_ptr.vmem [resolvable:$true] %s35
      %41 = dma.hbm_to_vmem [thread:$0]  %s34, 2048, %s36, [#allocation6], 128, 128, 8
    $region9: #{tpu_custom_call.1} parent=1 // pred_fallthru
      _
    // Predicated region
    $region10: #{tpu_custom_call.1} parent=1 // pred_check
      _
    $region11: #{tpu_custom_call.1} parent=1 // pred_check_branch
      %43 = sbr.rel (0) target = $region13
    $region12: #{tpu_custom_call.1} parent=1 // pred_region
      _
    $region13: #{tpu_custom_call.1} parent=1 // pred_fallthru
      _
    // Predicated region
    $region14: #{tpu_custom_call.1} parent=1 // pred_check
      _
    $region15: #{tpu_custom_call.1} parent=1 // pred_check_branch
      %45 = sbr.rel (0) target = $region17
    $region16: #{tpu_custom_call.1} parent=1 // pred_region
      %47 = vsyncadd [#allocation6], 0
      %s48 = sshll.u32 %s3, 4
      %s49 = int_to_ptr.hbm [resolvable:$true] %s48
      %s50 = sshll.u32 [#allocation7], 4
      %s51 = int_to_ptr.vmem [resolvable:$true] %s50
      %56 = dma.hbm_to_vmem [thread:$0]  %s49, 2048, %s51, [#allocation6], 128, 128, 8
    $region17: #{tpu_custom_call.1} parent=1 // pred_fallthru
      _
    // Predicated region
    $region18: #{tpu_custom_call.1} parent=1 // pred_check
      _
    $region19: #{tpu_custom_call.1} parent=1 // pred_check_branch
      %58 = sbr.rel (0) target = $region21
    $region20: #{tpu_custom_call.1} parent=1 // pred_region
      _
    $region21: #{tpu_custom_call.1} parent=1 // pred_fallthru
      _
    // Predicated region
    $region22: #{tpu_custom_call.1} parent=1 // pred_check
      _
    $region23: #{tpu_custom_call.1} parent=1 // pred_check_branch
      %60 = sbr.rel (0) target = $region25
    $region24: #{tpu_custom_call.1} parent=1 // pred_region
      %62 = vsyncadd [#allocation9], 0
      %s63 = sshll.u32 %s5, 4
      %s64 = int_to_ptr.hbm [resolvable:$true] %s63
      %s65 = sshll.u32 [#allocation8], 4
      %s66 = int_to_ptr.vmem [resolvable:$true] %s65
      %71 = dma.hbm_to_vmem [thread:$0]  %s64, 2048, %s66, [#allocation9], 128, 128, 8
    $region25: #{tpu_custom_call.1} parent=1 // pred_fallthru
      _
    // Predicated region
    $region26: #{tpu_custom_call.1} parent=1 // pred_check
      _
    $region27: #{tpu_custom_call.1} parent=1 // pred_check_branch
      %73 = sbr.rel (0) target = $region29
    $region28: #{tpu_custom_call.1} parent=1 // pred_region
      _
    $region29: #{tpu_custom_call.1} parent=1 // pred_fallthru
      _
    // Predicated region
    $region30: #{tpu_custom_call.1} parent=1 // pred_check
      _
    $region31: #{tpu_custom_call.1} parent=1 // pred_check_branch
      %75 = sbr.rel (0) target = $region33
    $region32: #{tpu_custom_call.1} parent=1 // pred_region
      %77 = dma.done [#allocation3], 256
    $region33: #{tpu_custom_call.1} parent=1 // pred_fallthru
      _
    // Predicated region
    $region34: #{tpu_custom_call.1} parent=1 // pred_check
      _
    $region35: #{tpu_custom_call.1} parent=1 // pred_check_branch
      %79 = sbr.rel (0) target = $region37
    $region36: #{tpu_custom_call.1} parent=1 // pred_region
      %81 = dma.done [#allocation6], 2048
    $region37: #{tpu_custom_call.1} parent=1 // pred_fallthru
      _
    // Predicated region
    $region38: #{tpu_custom_call.1} parent=1 // pred_check
      _
    $region39: #{tpu_custom_call.1} parent=1 // pred_check_branch
      %83 = sbr.rel (0) target = $region41
    $region40: #{tpu_custom_call.1} parent=1 // pred_region
      %85 = dma.done [#allocation6], 2048
    $region41: #{tpu_custom_call.1} parent=1 // pred_fallthru
      _
    // Predicated region
    $region42: #{tpu_custom_call.1} parent=1 // pred_check
      _
    $region43: #{tpu_custom_call.1} parent=1 // pred_check_branch
      %87 = sbr.rel (0) target = $region45
    $region44: #{tpu_custom_call.1} parent=1 // pred_region
      %89 = dma.done [#allocation9], 2048
    $region45: #{tpu_custom_call.1} parent=1 // pred_fallthru
      _
    %v90 = vld [vmem:[#allocation2] sm:$0xff]
    %v91 = vld [vmem:[#allocation2 + $0x8] sm:$0xff]
    %v92 = vld [vmem:[#allocation5] sm:$0xff]
    %v93 = vld [vmem:[#allocation5 + $0x8] sm:$0xff]
    %v94 = vld [vmem:[#allocation5 + $0x10] sm:$0xff]
    %v95 = vld [vmem:[#allocation5 + $0x18] sm:$0xff]
    %v96 = vld [vmem:[#allocation5 + $0x20] sm:$0xff]
    %v97 = vld [vmem:[#allocation5 + $0x28] sm:$0xff]
    %v98 = vld [vmem:[#allocation5 + $0x30] sm:$0xff]
    %v99 = vld [vmem:[#allocation5 + $0x38] sm:$0xff]
    %v100 = vld [vmem:[#allocation5 + $0x40] sm:$0xff]
    %v101 = vld [vmem:[#allocation5 + $0x48] sm:$0xff]
    %v102 = vld [vmem:[#allocation5 + $0x50] sm:$0xff]
    %v103 = vld [vmem:[#allocation5 + $0x58] sm:$0xff]
    %v104 = vld [vmem:[#allocation5 + $0x60] sm:$0xff]
    %v105 = vld [vmem:[#allocation5 + $0x68] sm:$0xff]
    %v106 = vld [vmem:[#allocation5 + $0x70] sm:$0xff]
    %v107 = vld [vmem:[#allocation5 + $0x78] sm:$0xff]
    %v108 = vld [vmem:[%s2] sm:$0x1]
    %v110 = vperm.slane %v108, 0
    %112 = vmatpush.msra.mxu0 %v107
    %113 = vmatpush.msra.mxu0 %v106
    %114 = vmatpush.msra.mxu0 %v105
    %115 = vmatpush.msra.mxu0 %v104
    %116 = vmatpush.msra.mxu0 %v103
    %117 = vmatpush.msra.mxu0 %v102
    %118 = vmatpush.msra.mxu0 %v101
    %119 = vmatpush.msra.mxu0 %v100
    %120 = vmatpush.msra.mxu0 %v99
    %121 = vmatpush.msra.mxu0 %v98
    %122 = vmatpush.msra.mxu0 %v97
    %123 = vmatpush.msra.mxu0 %v96
    %124 = vmatpush.msra.mxu0 %v95
    %125 = vmatpush.msra.mxu0 %v94
    %126 = vmatpush.msra.mxu0 %v93
    %127 = vmatpush.msra.mxu0 %v92
    %128 = vmatmul.f32.gmra.mxu0 %v90
    %v129 = vpop.f32.mrf.mxu0
    %v130 = vadd.f32 %v110, %v129
    %131 = vmatmul.f32.gmra.mxu0 %v91
    %v132 = vpop.f32.mrf.mxu0
    %v133 = vadd.f32 %v110, %v132
    %134 = vdwg.mxu0
    %v135 = vmax.f32 %v130, 0.0
    %v136 = vmax.f32 %v133, 0.0
    %v137 = vld [vmem:[#allocation7] sm:$0xff]
    %v138 = vld [vmem:[#allocation7 + $0x8] sm:$0xff]
    %v139 = vld [vmem:[#allocation7 + $0x10] sm:$0xff]
    %v140 = vld [vmem:[#allocation7 + $0x18] sm:$0xff]
    %v141 = vld [vmem:[#allocation7 + $0x20] sm:$0xff]
    %v142 = vld [vmem:[#allocation7 + $0x28] sm:$0xff]
    %v143 = vld [vmem:[#allocation7 + $0x30] sm:$0xff]
    %v144 = vld [vmem:[#allocation7 + $0x38] sm:$0xff]
    %v145 = vld [vmem:[#allocation7 + $0x40] sm:$0xff]
    %v146 = vld [vmem:[#allocation7 + $0x48] sm:$0xff]
    %v147 = vld [vmem:[#allocation7 + $0x50] sm:$0xff]
    %v148 = vld [vmem:[#allocation7 + $0x58] sm:$0xff]
    %v149 = vld [vmem:[#allocation7 + $0x60] sm:$0xff]
    %v150 = vld [vmem:[#allocation7 + $0x68] sm:$0xff]
    %v151 = vld [vmem:[#allocation7 + $0x70] sm:$0xff]
    %v152 = vld [vmem:[#allocation7 + $0x78] sm:$0xff]
    %v153 = vld [vmem:[%s4] sm:$0x1]
    %v155 = vperm.slane %v153, 0
    %157 = vmatpush.msra.mxu0 %v152
    %158 = vmatpush.msra.mxu0 %v151
    %159 = vmatpush.msra.mxu0 %v150
    %160 = vmatpush.msra.mxu0 %v149
    %161 = vmatpush.msra.mxu0 %v148
    %162 = vmatpush.msra.mxu0 %v147
    %163 = vmatpush.msra.mxu0 %v146
    %164 = vmatpush.msra.mxu0 %v145
    %165 = vmatpush.msra.mxu0 %v144
    %166 = vmatpush.msra.mxu0 %v143
    %167 = vmatpush.msra.mxu0 %v142
    %168 = vmatpush.msra.mxu0 %v141
    %169 = vmatpush.msra.mxu0 %v140
    %170 = vmatpush.msra.mxu0 %v139
    %171 = vmatpush.msra.mxu0 %v138
    %172 = vmatpush.msra.mxu0 %v137
    %173 = vmatmul.f32.gmra.mxu0 %v135
    %v174 = vpop.f32.mrf.mxu0
    %v175 = vadd.f32 %v155, %v174
    %176 = vmatmul.f32.gmra.mxu0 %v136
    %v177 = vpop.f32.mrf.mxu0
    %v178 = vadd.f32 %v155, %v177
    %179 = vdwg.mxu0
    %v180 = vmax.f32 %v175, 0.0
    %v181 = vmax.f32 %v178, 0.0
    %v182 = vld [vmem:[#allocation8] sm:$0xff]
    %v183 = vld [vmem:[#allocation8 + $0x8] sm:$0xff]
    %v184 = vld [vmem:[#allocation8 + $0x10] sm:$0xff]
    %v185 = vld [vmem:[#allocation8 + $0x18] sm:$0xff]
    %v186 = vld [vmem:[#allocation8 + $0x20] sm:$0xff]
    %v187 = vld [vmem:[#allocation8 + $0x28] sm:$0xff]
    %v188 = vld [vmem:[#allocation8 + $0x30] sm:$0xff]
    %v189 = vld [vmem:[#allocation8 + $0x38] sm:$0xff]
    %v190 = vld [vmem:[#allocation8 + $0x40] sm:$0xff]
    %v191 = vld [vmem:[#allocation8 + $0x48] sm:$0xff]
    %v192 = vld [vmem:[#allocation8 + $0x50] sm:$0xff]
    %v193 = vld [vmem:[#allocation8 + $0x58] sm:$0xff]
    %v194 = vld [vmem:[#allocation8 + $0x60] sm:$0xff]
    %v195 = vld [vmem:[#allocation8 + $0x68] sm:$0xff]
    %v196 = vld [vmem:[#allocation8 + $0x70] sm:$0xff]
    %v197 = vld [vmem:[#allocation8 + $0x78] sm:$0xff]
    %v198 = vld [vmem:[%s6] sm:$0x1]
    %v200 = vperm.slane %v198, 0
    %202 = vmatpush.msra.mxu0 %v197
    %203 = vmatpush.msra.mxu0 %v196
    %204 = vmatpush.msra.mxu0 %v195
    %205 = vmatpush.msra.mxu0 %v194
    %206 = vmatpush.msra.mxu0 %v193
    %207 = vmatpush.msra.mxu0 %v192
    %208 = vmatpush.msra.mxu0 %v191
    %209 = vmatpush.msra.mxu0 %v190
    %210 = vmatpush.msra.mxu0 %v189
    %211 = vmatpush.msra.mxu0 %v188
    %212 = vmatpush.msra.mxu0 %v187
    %213 = vmatpush.msra.mxu0 %v186
    %214 = vmatpush.msra.mxu0 %v185
    %215 = vmatpush.msra.mxu0 %v184
    %216 = vmatpush.msra.mxu0 %v183
    %217 = vmatpush.msra.mxu0 %v182
    %218 = vmatmul.f32.gmra.mxu0 %v180
    %v219 = vpop.f32.mrf.mxu0
    %v220 = vadd.f32 %v200, %v219
    %221 = vmatmul.f32.gmra.mxu0 %v181
    %v222 = vpop.f32.mrf.mxu0
    %v223 = vadd.f32 %v200, %v222
    %224 = vdwg.mxu0
    %225 = vmax.xlane.f32.xlu0 %v220
    %v226 = vpop.xlane.xlu0 %225
    %227 = vmax.xlane.f32.xlu0 %v223
    %v228 = vpop.xlane.xlu0 %227
    %v229 = vsub.f32 %v220, %v226
    %v230 = vsub.f32 %v223, %v228
    %v231 = vmul.f32 %v229, 1.442695
    %v232 = vpow.pop %v231
    %v233 = vmul.f32 %v230, 1.442695
    %v234 = vpow.pop %v233
    %235 = vadd.xlane.f32.xlu0 %v232
    %v236 = vpop.xlane.xlu0 %235
    %237 = vadd.xlane.f32.xlu0 %v234
    %v238 = vpop.xlane.xlu0 %237
    %v239 = vrcp.pop %v236
    %v240 = vrcp.pop %v238
    %v241 = vmul.f32 %v236, %v239
    %v242 = vmul.f32 %v238, %v240
    %v243 = vsub.f32 2.0, %v241
    %v244 = vsub.f32 2.0, %v242
    %v245 = vmul.f32 %v239, %v243
    %v246 = vmul.f32 %v240, %v244
    %v247 = vmul.f32 %v232, %v245
    %v248 = vmul.f32 %v234, %v246
    %249 = vst [vmem:[#allocation10] sm:$0xff] %v247
    %250 = vst [vmem:[#allocation10 + $0x8] sm:$0xff] %v248
    // Predicated region
    $region46: #{tpu_custom_call.1} parent=1 // pred_check
      _
    $region47: #{tpu_custom_call.1} parent=1 // pred_check_branch
      %252 = sbr.rel (0) target = $region49
    $region48: #{tpu_custom_call.1} parent=1 // pred_region
      %254 = vsyncadd [#allocation4], 0
      %s255 = sshll.u32 [#allocation10], 4
      %s256 = int_to_ptr.vmem [resolvable:$true] %s255
      %s257 = sshll.u32 %s7, 4
      %s258 = int_to_ptr.hbm [resolvable:$true] %s257
      %263 = dma.vmem_to_hbm [thread:$0]  %s256, 256, %s258, [#allocation4], 128, 128, 8
    $region49: #{tpu_custom_call.1} parent=1 // pred_fallthru
      _
    // Predicated region
    $region50: #{tpu_custom_call.1} parent=1 // pred_check
      _
    $region51: #{tpu_custom_call.1} parent=1 // pred_check_branch
      %265 = sbr.rel (0) target = $region53
    $region52: #{tpu_custom_call.1} parent=1 // pred_region
      %267 = dma.done [#allocation4], 256
    $region53: #{tpu_custom_call.1} parent=1 // pred_fallthru
      _
    %268 = vsyncpa [#allocation3], 1
    %269 = vsyncpa [#allocation6], 1
    %270 = vsyncpa [#allocation9], 1
    %271 = vsyncpa [#allocation4], 1

// kernel: tpu_custom_call.1
$region0: #{tpu_custom_call.1}
  #allocation0 [shape = 'u32[]', space=smem, size = 0x4, offset = 0x4, fixed_abs, tag = 'smem constant byte address 0x4 - core index']
  #allocation1 [shape = 'u32[72,128]{1,0:T(1,128)}', space=vmem, size = 0x9000, scoped, tag = 'internal scratch']
  %s0 = inlined_call_operand.hbm [shape: f32[16,128], index: 0, kind: input, shape index: {}]
  %s1 = inlined_call_operand.hbm [shape: f32[128,128], index: 1, kind: input, shape index: {}]
  %s2 = inlined_call_operand.vmem [shape: f32[1,128], index: 2, kind: input, shape index: {}]
  %s3 = inlined_call_operand.hbm [shape: f32[128,128], index: 3, kind: input, shape index: {}]
  %s4 = inlined_call_operand.vmem [shape: f32[1,128], index: 4, kind: input, shape index: {}]
  %s5 = inlined_call_operand.hbm [shape: f32[128,128], index: 5, kind: input, shape index: {}]
  %s6 = inlined_call_operand.vmem [shape: f32[1,128], index: 6, kind: input, shape index: {}]
  %s7 = inlined_call_operand.hbm [shape: f32[16,128], index: 7, kind: output, shape index: {}]
  %s8 = sld [smem:[#allocation0]]
  $region54: #{tpu_custom_call.1} parent=0
    _
  %s10 = ssub.s32 1, %s8
  %s11 = scalar_select 0, %s10, %s8
  $region1: #{tpu_custom_call.1} parent=0
    #allocation2 [shape = 'u8[8192]{0}', space=vmem, size = 0x2000, scoped, tag = 'input window, operand 0, single buffered']
    #allocation3 [shape = 's32[1]{0}', space=sflag, size = 0x4, scoped, tag = 'scoped memory for tpu_custom_call.1']
    #allocation4 [shape = 's32[1]{0}', space=sflag, size = 0x4, scoped, tag = 'scoped memory for tpu_custom_call.1']
    #allocation5 [shape = 'u8[65536]{0}', space=vmem, size = 0x10000, scoped, tag = 'input window, operand 1, single buffered']
    #allocation6 [shape = 's32[1]{0}', space=sflag, size = 0x4, scoped, tag = 'scoped memory for tpu_custom_call.1']
    #allocation7 [shape = 'u8[65536]{0}', space=vmem, size = 0x10000, scoped, tag = 'input window, operand 3, single buffered']
    #allocation8 [shape = 'u8[65536]{0}', space=vmem, size = 0x10000, scoped, tag = 'input window, operand 5, single buffered']
    #allocation9 [shape = 's32[1]{0}', space=sflag, size = 0x4, scoped, tag = 'scoped memory for tpu_custom_call.1']
    #allocation10 [shape = 'u8[8192]{0}', space=vmem, size = 0x2000, scoped, tag = 'output window, operand 0, single buffered']
    %12 = vsyncpa [#allocation3], 0
    %13 = vsyncpa [#allocation6], 0
    %14 = vsyncpa [#allocation9], 0
    %15 = vsyncpa [#allocation4], 0
    // Predicated region
    $region2: #{tpu_custom_call.1} parent=1 // pred_check
      _
    $region3: #{tpu_custom_call.1} parent=1 // pred_check_branch
      %17 = sbr.rel (0) target = $region5
    $region4: #{tpu_custom_call.1} parent=1 // pred_region
      %19 = vsyncadd [#allocation3], 0
      %s20 = sshll.u32 %s0, 4
      %s21 = int_to_ptr.hbm [resolvable:$true] %s20
      %s22 = sshll.u32 [#allocation2], 4
      %s23 = int_to_ptr.vmem [resolvable:$true] %s22
      %28 = dma.hbm_to_vmem [thread:$0]  %s21, 256, %s23, [#allocation3], 128, 128, 8
    $region5: #{tpu_custom_call.1} parent=1 // pred_fallthru
      _
    // Predicated region
    $region6: #{tpu_custom_call.1} parent=1 // pred_check
      _
    $region7: #{tpu_custom_call.1} parent=1 // pred_check_branch
      %30 = sbr.rel (0) target = $region9
    $region8: #{tpu_custom_call.1} parent=1 // pred_region
      %32 = vsyncadd [#allocation6], 0
      %s33 = sshll.u32 %s1, 4
      %s34 = int_to_ptr.hbm [resolvable:$true] %s33
      %s35 = sshll.u32 [#allocation5], 4
      %s36 = int_to_ptr.vmem [resolvable:$true] %s35
      %41 = dma.hbm_to_vmem [thread:$0]  %s34, 2048, %s36, [#allocation6], 128, 128, 8
    $region9: #{tpu_custom_call.1} parent=1 // pred_fallthru
      _
    // Predicated region
    $region10: #{tpu_custom_call.1} parent=1 // pred_check
      _
    $region11: #{tpu_custom_call.1} parent=1 // pred_check_branch
      %43 = sbr.rel (0) target = $region13
    $region12: #{tpu_custom_call.1} parent=1 // pred_region
      _
    $region13: #{tpu_custom_call.1} parent=1 // pred_fallthru
      _
    // Predicated region
    $region14: #{tpu_custom_call.1} parent=1 // pred_check
      _
    $region15: #{tpu_custom_call.1} parent=1 // pred_check_branch
      %45 = sbr.rel (0) target = $region17
    $region16: #{tpu_custom_call.1} parent=1 // pred_region
      %47 = vsyncadd [#allocation6], 0
      %s48 = sshll.u32 %s3, 4
      %s49 = int_to_ptr.hbm [resolvable:$true] %s48
      %s50 = sshll.u32 [#allocation7], 4
      %s51 = int_to_ptr.vmem [resolvable:$true] %s50
      %56 = dma.hbm_to_vmem [thread:$0]  %s49, 2048, %s51, [#allocation6], 128, 128, 8
    $region17: #{tpu_custom_call.1} parent=1 // pred_fallthru
      _
    // Predicated region
    $region18: #{tpu_custom_call.1} parent=1 // pred_check
      _
    $region19: #{tpu_custom_call.1} parent=1 // pred_check_branch
      %58 = sbr.rel (0) target = $region21
    $region20: #{tpu_custom_call.1} parent=1 // pred_region
      _
    $region21: #{tpu_custom_call.1} parent=1 // pred_fallthru
      _
    // Predicated region
    $region22: #{tpu_custom_call.1} parent=1 // pred_check
      _
    $region23: #{tpu_custom_call.1} parent=1 // pred_check_branch
      %60 = sbr.rel (0) target = $region25
    $region24: #{tpu_custom_call.1} parent=1 // pred_region
      %62 = vsyncadd [#allocation9], 0
      %s63 = sshll.u32 %s5, 4
      %s64 = int_to_ptr.hbm [resolvable:$true] %s63
      %s65 = sshll.u32 [#allocation8], 4
      %s66 = int_to_ptr.vmem [resolvable:$true] %s65
      %71 = dma.hbm_to_vmem [thread:$0]  %s64, 2048, %s66, [#allocation9], 128, 128, 8
    $region25: #{tpu_custom_call.1} parent=1 // pred_fallthru
      _
    // Predicated region
    $region26: #{tpu_custom_call.1} parent=1 // pred_check
      _
    $region27: #{tpu_custom_call.1} parent=1 // pred_check_branch
      %73 = sbr.rel (0) target = $region29
    $region28: #{tpu_custom_call.1} parent=1 // pred_region
      _
    $region29: #{tpu_custom_call.1} parent=1 // pred_fallthru
      _
    // Predicated region
    $region30: #{tpu_custom_call.1} parent=1 // pred_check
      _
    $region31: #{tpu_custom_call.1} parent=1 // pred_check_branch
      %75 = sbr.rel (0) target = $region33
    $region32: #{tpu_custom_call.1} parent=1 // pred_region
      %77 = dma.done [#allocation3], 256
    $region33: #{tpu_custom_call.1} parent=1 // pred_fallthru
      _
    // Predicated region
    $region34: #{tpu_custom_call.1} parent=1 // pred_check
      _
    $region35: #{tpu_custom_call.1} parent=1 // pred_check_branch
      %79 = sbr.rel (0) target = $region37
    $region36: #{tpu_custom_call.1} parent=1 // pred_region
      %81 = dma.done [#allocation6], 2048
    $region37: #{tpu_custom_call.1} parent=1 // pred_fallthru
      _
    // Predicated region
    $region38: #{tpu_custom_call.1} parent=1 // pred_check
      _
    $region39: #{tpu_custom_call.1} parent=1 // pred_check_branch
      %83 = sbr.rel (0) target = $region41
    $region40: #{tpu_custom_call.1} parent=1 // pred_region
      %85 = dma.done [#allocation6], 2048
    $region41: #{tpu_custom_call.1} parent=1 // pred_fallthru
      _
    // Predicated region
    $region42: #{tpu_custom_call.1} parent=1 // pred_check
      _
    $region43: #{tpu_custom_call.1} parent=1 // pred_check_branch
      %87 = sbr.rel (0) target = $region45
    $region44: #{tpu_custom_call.1} parent=1 // pred_region
      %89 = dma.done [#allocation9], 2048
    $region45: #{tpu_custom_call.1} parent=1 // pred_fallthru
      _
    %v90 = vld [vmem:[#allocation2] sm:$0xff]
    %v91 = vld [vmem:[#allocation2 + $0x8] sm:$0xff]
    %v92 = vld [vmem:[#allocation5] sm:$0xff]
    %v93 = vld [vmem:[#allocation5 + $0x8] sm:$0xff]
    %v94 = vld [vmem:[#allocation5 + $0x10] sm:$0xff]
    %v95 = vld [vmem:[#allocation5 + $0x18] sm:$0xff]
    %v96 = vld [vmem:[#allocation5 + $0x20] sm:$0xff]
    %v97 = vld [vmem:[#allocation5 + $0x28] sm:$0xff]
    %v98 = vld [vmem:[#allocation5 + $0x30] sm:$0xff]
    %v99 = vld [vmem:[#allocation5 + $0x38] sm:$0xff]
    %v100 = vld [vmem:[#allocation5 + $0x40] sm:$0xff]
    %v101 = vld [vmem:[#allocation5 + $0x48] sm:$0xff]
    %v102 = vld [vmem:[#allocation5 + $0x50] sm:$0xff]
    %v103 = vld [vmem:[#allocation5 + $0x58] sm:$0xff]
    %v104 = vld [vmem:[#allocation5 + $0x60] sm:$0xff]
    %v105 = vld [vmem:[#allocation5 + $0x68] sm:$0xff]
    %v106 = vld [vmem:[#allocation5 + $0x70] sm:$0xff]
    %v107 = vld [vmem:[#allocation5 + $0x78] sm:$0xff]
    %v108 = vld [vmem:[%s2] sm:$0x1]
    %v110 = vperm.slane %v108, 0
    %112 = vmatpush.msra.mxu0 %v107
    %113 = vmatpush.msra.mxu0 %v106
    %114 = vmatpush.msra.mxu0 %v105
    %115 = vmatpush.msra.mxu0 %v104
    %116 = vmatpush.msra.mxu0 %v103
    %117 = vmatpush.msra.mxu0 %v102
    %118 = vmatpush.msra.mxu0 %v101
    %119 = vmatpush.msra.mxu0 %v100
    %120 = vmatpush.msra.mxu0 %v99
    %121 = vmatpush.msra.mxu0 %v98
    %122 = vmatpush.msra.mxu0 %v97
    %123 = vmatpush.msra.mxu0 %v96
    %124 = vmatpush.msra.mxu0 %v95
    %125 = vmatpush.msra.mxu0 %v94
    %126 = vmatpush.msra.mxu0 %v93
    %127 = vmatpush.msra.mxu0 %v92
    %128 = vmatmul.f32.gmra.mxu0 %v90
    %v129 = vpop.f32.mrf.mxu0
    %v130 = vadd.f32 %v110, %v129
    %131 = vmatmul.f32.gmra.mxu0 %v91
    %v132 = vpop.f32.mrf.mxu0
    %v133 = vadd.f32 %v110, %v132
    %134 = vdwg.mxu0
    %v135 = vmax.f32 %v130, 0.0
    %v136 = vmax.f32 %v133, 0.0
    %v137 = vld [vmem:[#allocation7] sm:$0xff]
    %v138 = vld [vmem:[#allocation7 + $0x8] sm:$0xff]
    %v139 = vld [vmem:[#allocation7 + $0x10] sm:$0xff]
    %v140 = vld [vmem:[#allocation7 + $0x18] sm:$0xff]
    %v141 = vld [vmem:[#allocation7 + $0x20] sm:$0xff]
    %v142 = vld [vmem:[#allocation7 + $0x28] sm:$0xff]
    %v143 = vld [vmem:[#allocation7 + $0x30] sm:$0xff]
    %v144 = vld [vmem:[#allocation7 + $0x38] sm:$0xff]
    %v145 = vld [vmem:[#allocation7 + $0x40] sm:$0xff]
    %v146 = vld [vmem:[#allocation7 + $0x48] sm:$0xff]
    %v147 = vld [vmem:[#allocation7 + $0x50] sm:$0xff]
    %v148 = vld [vmem:[#allocation7 + $0x58] sm:$0xff]
    %v149 = vld [vmem:[#allocation7 + $0x60] sm:$0xff]
    %v150 = vld [vmem:[#allocation7 + $0x68] sm:$0xff]
    %v151 = vld [vmem:[#allocation7 + $0x70] sm:$0xff]
    %v152 = vld [vmem:[#allocation7 + $0x78] sm:$0xff]
    %v153 = vld [vmem:[%s4] sm:$0x1]
    %v155 = vperm.slane %v153, 0
    %157 = vmatpush.msra.mxu0 %v152
    %158 = vmatpush.msra.mxu0 %v151
    %159 = vmatpush.msra.mxu0 %v150
    %160 = vmatpush.msra.mxu0 %v149
    %161 = vmatpush.msra.mxu0 %v148
    %162 = vmatpush.msra.mxu0 %v147
    %163 = vmatpush.msra.mxu0 %v146
    %164 = vmatpush.msra.mxu0 %v145
    %165 = vmatpush.msra.mxu0 %v144
    %166 = vmatpush.msra.mxu0 %v143
    %167 = vmatpush.msra.mxu0 %v142
    %168 = vmatpush.msra.mxu0 %v141
    %169 = vmatpush.msra.mxu0 %v140
    %170 = vmatpush.msra.mxu0 %v139
    %171 = vmatpush.msra.mxu0 %v138
    %172 = vmatpush.msra.mxu0 %v137
    %173 = vmatmul.f32.gmra.mxu0 %v135
    %v174 = vpop.f32.mrf.mxu0
    %v175 = vadd.f32 %v155, %v174
    %176 = vmatmul.f32.gmra.mxu0 %v136
    %v177 = vpop.f32.mrf.mxu0
    %v178 = vadd.f32 %v155, %v177
    %179 = vdwg.mxu0
    %v180 = vmax.f32 %v175, 0.0
    %v181 = vmax.f32 %v178, 0.0
    %v182 = vld [vmem:[#allocation8] sm:$0xff]
    %v183 = vld [vmem:[#allocation8 + $0x8] sm:$0xff]
    %v184 = vld [vmem:[#allocation8 + $0x10] sm:$0xff]
    %v185 = vld [vmem:[#allocation8 + $0x18] sm:$0xff]
    %v186 = vld [vmem:[#allocation8 + $0x20] sm:$0xff]
    %v187 = vld [vmem:[#allocation8 + $0x28] sm:$0xff]
    %v188 = vld [vmem:[#allocation8 + $0x30] sm:$0xff]
    %v189 = vld [vmem:[#allocation8 + $0x38] sm:$0xff]
    %v190 = vld [vmem:[#allocation8 + $0x40] sm:$0xff]
    %v191 = vld [vmem:[#allocation8 + $0x48] sm:$0xff]
    %v192 = vld [vmem:[#allocation8 + $0x50] sm:$0xff]
    %v193 = vld [vmem:[#allocation8 + $0x58] sm:$0xff]
    %v194 = vld [vmem:[#allocation8 + $0x60] sm:$0xff]
    %v195 = vld [vmem:[#allocation8 + $0x68] sm:$0xff]
    %v196 = vld [vmem:[#allocation8 + $0x70] sm:$0xff]
    %v197 = vld [vmem:[#allocation8 + $0x78] sm:$0xff]
    %v198 = vld [vmem:[%s6] sm:$0x1]
    %v200 = vperm.slane %v198, 0
    %202 = vmatpush.msra.mxu0 %v197
    %203 = vmatpush.msra.mxu0 %v196
    %204 = vmatpush.msra.mxu0 %v195
    %205 = vmatpush.msra.mxu0 %v194
    %206 = vmatpush.msra.mxu0 %v193
    %207 = vmatpush.msra.mxu0 %v192
    %208 = vmatpush.msra.mxu0 %v191
    %209 = vmatpush.msra.mxu0 %v190
    %210 = vmatpush.msra.mxu0 %v189
    %211 = vmatpush.msra.mxu0 %v188
    %212 = vmatpush.msra.mxu0 %v187
    %213 = vmatpush.msra.mxu0 %v186
    %214 = vmatpush.msra.mxu0 %v185
    %215 = vmatpush.msra.mxu0 %v184
    %216 = vmatpush.msra.mxu0 %v183
    %217 = vmatpush.msra.mxu0 %v182
    %218 = vmatmul.f32.gmra.mxu0 %v180
    %v219 = vpop.f32.mrf.mxu0
    %v220 = vadd.f32 %v200, %v219
    %221 = vmatmul.f32.gmra.mxu0 %v181
    %v222 = vpop.f32.mrf.mxu0
    %v223 = vadd.f32 %v200, %v222
    %224 = vdwg.mxu0
    %225 = vmax.xlane.f32.xlu0 %v220
    %v226 = vpop.xlane.xlu0 %225
    %227 = vmax.xlane.f32.xlu0 %v223
    %v228 = vpop.xlane.xlu0 %227
    %v229 = vsub.f32 %v220, %v226
    %v230 = vsub.f32 %v223, %v228
    %v231 = vmul.f32 %v229, 1.442695
    %v232 = vpow.pop %v231
    %v233 = vmul.f32 %v230, 1.442695
    %v234 = vpow.pop %v233
    %235 = vadd.xlane.f32.xlu0 %v232
    %v236 = vpop.xlane.xlu0 %235
    %237 = vadd.xlane.f32.xlu0 %v234
    %v238 = vpop.xlane.xlu0 %237
    %v239 = vrcp.pop %v236
    %v240 = vrcp.pop %v238
    %v241 = vmul.f32 %v236, %v239
    %v242 = vmul.f32 %v238, %v240
    %v243 = vsub.f32 2.0, %v241
    %v244 = vsub.f32 2.0, %v242
    %v245 = vmul.f32 %v239, %v243
    %v246 = vmul.f32 %v240, %v244
    %v247 = vmul.f32 %v232, %v245
    %v248 = vmul.f32 %v234, %v246
    %249 = vst [vmem:[#allocation10] sm:$0xff] %v247
    %250 = vst [vmem:[#allocation10 + $0x8] sm:$0xff] %v248
    // Predicated region
    $region46: #{tpu_custom_call.1} parent=1 // pred_check
      _
    $region47: #{tpu_custom_call.1} parent=1 // pred_check_branch
      %252 = sbr.rel (0) target = $region49
    $region48: #{tpu_custom_call.1} parent=1 // pred_region
      %254 = vsyncadd [#allocation4], 0
      %s255 = sshll.u32 [#allocation10], 4
      %s256 = int_to_ptr.vmem [resolvable:$true] %s255
      %s257 = sshll.u32 %s7, 4
      %s258 = int_to_ptr.hbm [resolvable:$true] %s257
      %263 = dma.vmem_to_hbm [thread:$0]  %s256, 256, %s258, [#allocation4], 128, 128, 8
    $region49: #{tpu_custom_call.1} parent=1 // pred_fallthru
      _
    // Predicated region
    $region50: #{tpu_custom_call.1} parent=1 // pred_check
      _
    $region51: #{tpu_custom_call.1} parent=1 // pred_check_branch
      %265 = sbr.rel (0) target = $region53
    $region52: #{tpu_custom_call.1} parent=1 // pred_region
      %267 = dma.done [#allocation4], 256
    $region53: #{tpu_custom_call.1} parent=1 // pred_fallthru
      _
    %268 = vsyncpa [#allocation3], 1
    %269 = vsyncpa [#allocation6], 1
    %270 = vsyncpa [#allocation9], 1
    %271 = vsyncpa [#allocation4], 1

</llo_original>
